<compile_context>
chip_gen: v7x
topology: tpu7x:2x2x1
jax: 0.10.0
libtpu: 0.0.40
codegen_flags: <defaults>
</compile_context>

<pallas_src>
import jax
import jax.numpy as jnp
from jax.experimental import pallas as pl
from jax.experimental.pallas import tpu as pltpu

# ---------------- model configuration (consistent with the module) -----------
EMB_SZS = [(10, 4), (7, 3)]           # (num_embeddings, embedding_dim)
N_EMB = sum(nf for _, nf in EMB_SZS)  # 7
N_CONT = 3
N_IN = N_EMB + N_CONT                 # 10
LAYERS = [32, 16]                     # sizes = [11, 32, 16, 5]
H1, H2 = LAYERS
OUT_SZ = 5
N_CAT_IMP = 1
N_CONT_IMP = 0
N_IMP = N_CAT_IMP + N_CONT_IMP        # 1
EPS = 1e-5
BATCH = 8
Y_RANGE = None                        # y_range=None -> identity tail

# packed bias row layout: [b1 | b2 | b3 | w3b] padded to a 128-lane row
_B1_OFF = 0
_B2_OFF = _B1_OFF + H1
_B3_OFF = _B2_OFF + H2
_W3B_OFF = _B3_OFF + OUT_SZ
_ROW_LEN = _W3B_OFF + OUT_SZ          # 58
ROW_PAD = ((_ROW_LEN + 127) // 128) * 128   # 128


# ------------------------------- Pallas kernel --------------------------------
def _tabular_mlp_kernel(x_ref, w1_ref, w2_ref, w3_ref, row_ref, out_ref):
    x = x_ref[...]                                        # [TB, 10]
    # x_cat_imp = first embedding column (before dropout; dropout is a no-op in eval)
    x_cat_imp = x[:, :N_CAT_IMP].astype(jnp.float32)      # [TB, 1]

    row = row_ref[...]                                    # [1, ROW_PAD] f32
    b1 = row[:, _B1_OFF:_B1_OFF + H1]                     # [1, 32]
    b2 = row[:, _B2_OFF:_B2_OFF + H2]                     # [1, 16]
    b3 = row[:, _B3_OFF:_B3_OFF + OUT_SZ]                 # [1, 5]
    w3b = row[:, _W3B_OFF:_W3B_OFF + OUT_SZ]              # [1, 5]

    # layer 1 (bn_cont folded into w1/b1) + ReLU
    h = jnp.dot(x, w1_ref[...], preferred_element_type=jnp.float32) + b1
    h = jnp.maximum(h, 0.0)

    # layer 2 (bn1 folded into w2/b2) + ReLU
    h = jnp.dot(h.astype(w2_ref.dtype), w2_ref[...],
                preferred_element_type=jnp.float32) + b2
    h = jnp.maximum(h, 0.0)

    # layer 3 (bn2 folded into w3a/b3); rank-1 x_cat_imp contribution on the VPU
    out = (jnp.dot(h.astype(w3_ref.dtype), w3_ref[...],
                   preferred_element_type=jnp.float32)
           + x_cat_imp * w3b
           + b3)
    out_ref[...] = out.astype(out_ref.dtype)
    # y_range sigmoid rescale omitted because y_range=None for this config.


# ------------------------------- wrapper ---------------------------------------
def tabular_model_forward(params, x_cat, x_cont, tb=None, use_bf16=None):
    # --- plain-JAX glue: embedding gather + concat -----------------------------
    # TODO(synk): for very large batches the gather could move in-kernel via
    # PrefetchScalarGridSpec; left as XLA glue since fixed overhead dominates here.
    emb_pieces = [params["emb_tables"][i][x_cat[:, i]] for i in range(len(EMB_SZS))]
    x = jnp.concatenate(emb_pieces + [x_cont.astype(jnp.float32)], axis=1)  # [B, 10]
    x = x.astype(jnp.float32)
    B = x.shape[0]

    # --- fold eval-mode BatchNorms into the linear weights/biases --------------
    s_c = params["cont_g"] * jax.lax.rsqrt(params["cont_v"] + EPS)
    t_c = params["cont_b"] - params["cont_m"] * s_c
    w1 = params["w1"]                                   # [10, 32]
    w1e, w1c = w1[:N_EMB], w1[N_EMB:]
    w1_f = jnp.concatenate([w1e, s_c[:, None] * w1c], axis=0)      # [10, 32]
    b1_f = params["b1"] + t_c @ w1c                                # [32]

    s1 = params["g1"] * jax.lax.rsqrt(params["v1"] + EPS)
    t1 = params["be1"] - params["m1"] * s1
    w2_f = s1[:, None] * params["w2"]                              # [32, 16]
    b2_f = params["b2"] + t1 @ params["w2"]                        # [16]

    s2 = params["g2"] * jax.lax.rsqrt(params["v2"] + EPS)
    t2 = params["be2"] - params["m2"] * s2
    w3 = params["w3"]                                   # [17, 5]
    w3a, w3b = w3[:H2], w3[H2:]                         # [16,5], [1,5]
    w3a_f = s2[:, None] * w3a
    b3_f = params["b3"] + t2 @ w3a                                 # [5]

    # pack all (1,N) rows into a single (1, ROW_PAD) f32 block
    packed = jnp.concatenate([b1_f, b2_f, b3_f, w3b.reshape(-1)]).astype(jnp.float32)
    packed = jnp.pad(packed, (0, ROW_PAD - _ROW_LEN)).reshape(1, ROW_PAD)

    # --- batch tiling -----------------------------------------------------------
    if tb is None:
        tb = min(512, ((B + 7) // 8) * 8)               # multiple of 8, <= 512
    n_tiles = pl.cdiv(B, tb)
    Bp = n_tiles * tb
    if Bp != B:
        x = jnp.pad(x, ((0, Bp - B), (0, 0)))

    # optional bf16 MXU inputs (f32 accumulate) once a tile holds >=16 rows
    if use_bf16 is None:
        use_bf16 = tb >= 16
    mxu_dtype = jnp.bfloat16 if use_bf16 else jnp.float32
    x_mxu = x.astype(mxu_dtype)
    w1_mxu = w1_f.astype(mxu_dtype)
    w2_mxu = w2_f.astype(mxu_dtype)
    w3_mxu = w3a_f.astype(mxu_dtype)

    out = pl.pallas_call(
        _tabular_mlp_kernel,
        out_shape=jax.ShapeDtypeStruct((Bp, OUT_SZ), jnp.float32),
        grid=(n_tiles,),
        in_specs=[
            pl.BlockSpec((tb, N_IN), lambda i: (i, 0)),
            pl.BlockSpec(w1_mxu.shape, lambda i: (0, 0)),
            pl.BlockSpec(w2_mxu.shape, lambda i: (0, 0)),
            pl.BlockSpec(w3_mxu.shape, lambda i: (0, 0)),
            pl.BlockSpec((1, ROW_PAD), lambda i: (0, 0)),
        ],
        out_specs=pl.BlockSpec((tb, OUT_SZ), lambda i: (i, 0)),
        compiler_params=pltpu.CompilerParams(dimension_semantics=("parallel",)),
    )(x_mxu, w1_mxu, w2_mxu, w3_mxu, packed)

    return out[:B]


# --------------------------- pure-JAX reference ---------------------------------
def tabular_model_reference(params, x_cat, x_cont):
    emb_pieces = [params["emb_tables"][i][x_cat[:, i]] for i in range(len(EMB_SZS))]
    x = jnp.concatenate(emb_pieces, axis=1).astype(jnp.float32)
    x_cat_imp = x[:, :N_CAT_IMP]
    xc = ((x_cont - params["cont_m"]) / jnp.sqrt(params["cont_v"] + EPS)
          * params["cont_g"] + params["cont_b"])
    x = jnp.concatenate([x, xc], axis=1)
    x = jnp.maximum(x @ params["w1"] + params["b1"], 0.0)
    x = (x - params["m1"]) / jnp.sqrt(params["v1"] + EPS) * params["g1"] + params["be1"]
    x = jnp.maximum(x @ params["w2"] + params["b2"], 0.0)
    x = (x - params["m2"]) / jnp.sqrt(params["v2"] + EPS) * params["g2"] + params["be2"]
    x = jnp.concatenate([x, x_cat_imp], axis=1)
    return x @ params["w3"] + params["b3"]


# --------------------------- deterministic init ----------------------------------
def init_params(key):
    h1, h2 = LAYERS
    in1 = N_EMB + N_CONT            # sizes[0] - n_imp
    in3 = h2 + N_IMP
    ks = jax.random.split(key, 16)
    p = {}
    p["emb_tables"] = [
        0.1 * jax.random.normal(ks[i], (ni, nf), jnp.float32)
        for i, (ni, nf) in enumerate(EMB_SZS)
    ]
    p["cont_g"] = 1.0 + 0.1 * jax.random.normal(ks[2], (N_CONT,), jnp.float32)
    p["cont_b"] = 0.1 * jax.random.normal(ks[3], (N_CONT,), jnp.float32)
    p["cont_m"] = 0.1 * jax.random.normal(ks[4], (N_CONT,), jnp.float32)
    p["cont_v"] = 1.0 + 0.1 * jax.random.uniform(ks[5], (N_CONT,), jnp.float32)

    p["w1"] = 0.1 * jax.random.normal(ks[6], (in1, h1), jnp.float32)
    p["b1"] = 0.1 * jax.random.normal(ks[7], (h1,), jnp.float32)
    p["g1"] = 1.0 + 0.1 * jax.random.normal(ks[8], (h1,), jnp.float32)
    p["be1"] = 0.1 * jax.random.normal(ks[8], (h1,), jnp.float32)
    p["m1"] = 0.1 * jax.random.normal(ks[9], (h1,), jnp.float32)
    p["v1"] = 1.0 + 0.1 * jax.random.uniform(ks[9], (h1,), jnp.float32)

    p["w2"] = 0.1 * jax.random.normal(ks[10], (h1, h2), jnp.float32)
    p["b2"] = 0.1 * jax.random.normal(ks[11], (h2,), jnp.float32)
    p["g2"] = 1.0 + 0.1 * jax.random.normal(ks[12], (h2,), jnp.float32)
    p["be2"] = 0.1 * jax.random.normal(ks[12], (h2,), jnp.float32)
    p["m2"] = 0.1 * jax.random.normal(ks[13], (h2,), jnp.float32)
    p["v2"] = 1.0 + 0.1 * jax.random.uniform(ks[13], (h2,), jnp.float32)

    p["w3"] = 0.1 * jax.random.normal(ks[14], (in3, OUT_SZ), jnp.float32)
    p["b3"] = 0.1 * jax.random.normal(ks[15], (OUT_SZ,), jnp.float32)
    return p


if __name__ == "__main__":
    key = jax.random.PRNGKey(0)
    kp, kc1, kc2 = jax.random.split(key, 3)
    params = init_params(kp)

    x_cat = jnp.stack(
        [jax.random.randint(kc1, (BATCH,), 0, EMB_SZS[i][0], dtype=jnp.int32)
         for i in range(len(EMB_SZS))], axis=1)                     # [B, 2] int32
    x_cont = jax.random.normal(kc2, (BATCH, N_CONT), jnp.float32)   # [B, 3] f32

    out = tabular_model_forward(params, x_cat, x_cont)
    out = jax.block_until_ready(out)

    ref = tabular_model_reference(params, x_cat, x_cont)
    assert out.shape == (BATCH, OUT_SZ)
    assert jnp.allclose(out, ref, atol=1e-4, rtol=1e-4), "mismatch vs reference"
    print("KERNEL_OK")
</pallas_src>

<mosaic_0001>
module attributes {stable_mosaic.version = 11 : i64} {
  func.func @_tabular_mlp_kernel(%arg0: i32, %arg1: memref<8x10xf32, #tpu.memory_space<vmem>>, %arg2: memref<10x32xf32, #tpu.memory_space<vmem>>, %arg3: memref<32x16xf32, #tpu.memory_space<vmem>>, %arg4: memref<16x5xf32, #tpu.memory_space<vmem>>, %arg5: memref<1x128xf32, #tpu.memory_space<vmem>>, %arg6: memref<8x5xf32, #tpu.memory_space<vmem>>) attributes {dimension_semantics = [#tpu.dimension_semantics<parallel>], iteration_bounds = array<i64: 1>, scalar_prefetch = 0 : i64, scratch_operands = 0 : i64, tpu.core_type = #tpu.core_type<tc>, window_params = [{transform_indices = @transform_0, window_bounds = array<i64: 8, 10>}, {pipeline_mode = #tpu.pipeline_mode<synchronous>, transform_indices = @transform_1, window_bounds = array<i64: 10, 32>}, {pipeline_mode = #tpu.pipeline_mode<synchronous>, transform_indices = @transform_2, window_bounds = array<i64: 32, 16>}, {pipeline_mode = #tpu.pipeline_mode<synchronous>, transform_indices = @transform_3, window_bounds = array<i64: 16, 5>}, {pipeline_mode = #tpu.pipeline_mode<synchronous>, transform_indices = @transform_4, window_bounds = array<i64: 1, 128>}, {transform_indices = @transform_5, window_bounds = array<i64: 8, 5>}]} {
    %c0 = arith.constant 0 : index
    %c0_0 = arith.constant 0 : index
    %0 = vector.load %arg1[%c0, %c0_0] : memref<8x10xf32, #tpu.memory_space<vmem>>, vector<8x10xf32>
    %1 = vector.extract_strided_slice %0 {offsets = [0, 0], sizes = [8, 1], strides = [1, 1]} : vector<8x10xf32> to vector<8x1xf32>
    %c0_1 = arith.constant 0 : index
    %c0_2 = arith.constant 0 : index
    %2 = vector.load %arg5[%c0_1, %c0_2] : memref<1x128xf32, #tpu.memory_space<vmem>>, vector<1x128xf32>
    %3 = vector.extract_strided_slice %2 {offsets = [0, 0], sizes = [1, 32], strides = [1, 1]} : vector<1x128xf32> to vector<1x32xf32>
    %4 = vector.extract_strided_slice %2 {offsets = [0, 32], sizes = [1, 16], strides = [1, 1]} : vector<1x128xf32> to vector<1x16xf32>
    %5 = vector.extract_strided_slice %2 {offsets = [0, 48], sizes = [1, 5], strides = [1, 1]} : vector<1x128xf32> to vector<1x5xf32>
    %6 = vector.extract_strided_slice %2 {offsets = [0, 53], sizes = [1, 5], strides = [1, 1]} : vector<1x128xf32> to vector<1x5xf32>
    %c0_3 = arith.constant 0 : index
    %c0_4 = arith.constant 0 : index
    %7 = vector.load %arg2[%c0_3, %c0_4] : memref<10x32xf32, #tpu.memory_space<vmem>>, vector<10x32xf32>
    %cst = arith.constant dense<0.000000e+00> : vector<8x32xf32>
    %8 = tpu.matmul %0, %7, %cst {dimension_numbers = #tpu.dot_dimension_numbers<[1], [0], [0], [1], [0, 0, 1, 1], [], []>} : vector<8x10xf32>, vector<10x32xf32>, vector<8x32xf32> -> vector<8x32xf32>
    %9 = vector.broadcast %3 : vector<1x32xf32> to vector<8x32xf32>
    %10 = arith.addf %8, %9 : vector<8x32xf32>
    %cst_5 = arith.constant 0.000000e+00 : f32
    %11 = vector.broadcast %cst_5 : f32 to vector<8x32xf32>
    %12 = arith.maximumf %10, %11 : vector<8x32xf32>
    %c0_6 = arith.constant 0 : index
    %c0_7 = arith.constant 0 : index
    %13 = vector.load %arg3[%c0_6, %c0_7] : memref<32x16xf32, #tpu.memory_space<vmem>>, vector<32x16xf32>
    %cst_8 = arith.constant dense<0.000000e+00> : vector<8x16xf32>
    %14 = tpu.matmul %12, %13, %cst_8 {dimension_numbers = #tpu.dot_dimension_numbers<[1], [0], [0], [1], [0, 0, 1, 1], [], []>} : vector<8x32xf32>, vector<32x16xf32>, vector<8x16xf32> -> vector<8x16xf32>
    %15 = vector.broadcast %4 : vector<1x16xf32> to vector<8x16xf32>
    %16 = arith.addf %14, %15 : vector<8x16xf32>
    %cst_9 = arith.constant 0.000000e+00 : f32
    %17 = vector.broadcast %cst_9 : f32 to vector<8x16xf32>
    %18 = arith.maximumf %16, %17 : vector<8x16xf32>
    %c0_10 = arith.constant 0 : index
    %c0_11 = arith.constant 0 : index
    %19 = vector.load %arg4[%c0_10, %c0_11] : memref<16x5xf32, #tpu.memory_space<vmem>>, vector<16x5xf32>
    %cst_12 = arith.constant dense<0.000000e+00> : vector<8x5xf32>
    %20 = tpu.matmul %18, %19, %cst_12 {dimension_numbers = #tpu.dot_dimension_numbers<[1], [0], [0], [1], [0, 0, 1, 1], [], []>} : vector<8x16xf32>, vector<16x5xf32>, vector<8x5xf32> -> vector<8x5xf32>
    %21 = vector.broadcast %1 : vector<8x1xf32> to vector<8x5xf32>
    %22 = vector.broadcast %6 : vector<1x5xf32> to vector<8x5xf32>
    %23 = arith.mulf %21, %22 : vector<8x5xf32>
    %24 = arith.addf %20, %23 : vector<8x5xf32>
    %25 = vector.broadcast %5 : vector<1x5xf32> to vector<8x5xf32>
    %26 = arith.addf %24, %25 : vector<8x5xf32>
    %c0_13 = arith.constant 0 : index
    %c0_14 = arith.constant 0 : index
    %27 = vector.load %arg6[%c0_13, %c0_14] : memref<8x5xf32, #tpu.memory_space<vmem>>, vector<8x5xf32>
    tpu.vector_store %arg6[%c0_13, %c0_14], %26 {strides = array<i32>} : memref<8x5xf32, #tpu.memory_space<vmem>>, vector<8x5xf32>,
    return
  }
  func.func @transform_0(%arg0: i32) -> (i32, i32) {
    %c0_i32 = arith.constant 0 : i32
    %c0_i32_0 = arith.constant 0 : i32
    return %arg0, %c0_i32 : i32, i32
  }
  func.func @transform_1(%arg0: i32) -> (i32, i32) {
    %c0_i32 = arith.constant 0 : i32
    %c0_i32_0 = arith.constant 0 : i32
    %c0_i32_1 = arith.constant 0 : i32
    return %c0_i32, %c0_i32_0 : i32, i32
  }
  func.func @transform_2(%arg0: i32) -> (i32, i32) {
    %c0_i32 = arith.constant 0 : i32
    %c0_i32_0 = arith.constant 0 : i32
    %c0_i32_1 = arith.constant 0 : i32
    return %c0_i32, %c0_i32_0 : i32, i32
  }
  func.func @transform_3(%arg0: i32) -> (i32, i32) {
    %c0_i32 = arith.constant 0 : i32
    %c0_i32_0 = arith.constant 0 : i32
    %c0_i32_1 = arith.constant 0 : i32
    return %c0_i32, %c0_i32_0 : i32, i32
  }
  func.func @transform_4(%arg0: i32) -> (i32, i32) {
    %c0_i32 = arith.constant 0 : i32
    %c0_i32_0 = arith.constant 0 : i32
    %c0_i32_1 = arith.constant 0 : i32
    return %c0_i32, %c0_i32_0 : i32, i32
  }
  func.func @transform_5(%arg0: i32) -> (i32, i32) {
    %c0_i32 = arith.constant 0 : i32
    %c0_i32_0 = arith.constant 0 : i32
    return %arg0, %c0_i32 : i32, i32
  }
}

</mosaic_0001>

<llo_original>
// kernel: tpu_custom_call.1
$region0: #{tpu_custom_call.1}
  #allocation0 [shape = 'u32[]', space=smem, size = 0x4, offset = 0x4, fixed_abs, tag = 'smem constant byte address 0x4 - core index']
  #allocation1 [shape = 'u32[144,128]{1,0:T(1,128)}', space=vmem, size = 0x12000, scoped, tag = 'internal scratch']
  %s0 = inlined_call_operand.vmem [shape: f32[8,10], index: 0, kind: input, shape index: {}]
  %s1 = inlined_call_operand.vmem [shape: f32[10,32], index: 1, kind: input, shape index: {}]
  %s2 = inlined_call_operand.vmem [shape: f32[32,16], index: 2, kind: input, shape index: {}]
  %s3 = inlined_call_operand.vmem [shape: f32[16,5], index: 3, kind: input, shape index: {}]
  %s4 = inlined_call_operand.vmem [shape: f32[1,128], index: 4, kind: input, shape index: {}]
  %s5 = inlined_call_operand.hbm [shape: f32[8,5], index: 5, kind: output, shape index: {}]
  %s6 = sld [smem:[#allocation0]]
  $region30: #{tpu_custom_call.1} parent=0
    _
  %s8 = ssub.s32 1, %s6
  %s9 = scalar_select 0, %s8, %s6
  $region1: #{tpu_custom_call.1} parent=0
    #allocation2 [shape = 'u8[4096]{0}', space=vmem, size = 0x1000, scoped, tag = 'output window, operand 0, single buffered']
    #allocation3 [shape = 's32[1]{0}', space=sflag, size = 0x4, scoped, tag = 'scoped memory for tpu_custom_call.1']
    %10 = vsyncpa [#allocation3], 0
    // Predicated region
    $region2: #{tpu_custom_call.1} parent=1 // pred_check
      _
    $region3: #{tpu_custom_call.1} parent=1 // pred_check_branch
      %12 = sbr.rel (0) target = $region5
    $region4: #{tpu_custom_call.1} parent=1 // pred_region
      _
    $region5: #{tpu_custom_call.1} parent=1 // pred_fallthru
      _
    // Predicated region
    $region6: #{tpu_custom_call.1} parent=1 // pred_check
      _
    $region7: #{tpu_custom_call.1} parent=1 // pred_check_branch
      %14 = sbr.rel (0) target = $region9
    $region8: #{tpu_custom_call.1} parent=1 // pred_region
      _
    $region9: #{tpu_custom_call.1} parent=1 // pred_fallthru
      _
    // Predicated region
    $region10: #{tpu_custom_call.1} parent=1 // pred_check
      _
    $region11: #{tpu_custom_call.1} parent=1 // pred_check_branch
      %16 = sbr.rel (0) target = $region13
    $region12: #{tpu_custom_call.1} parent=1 // pred_region
      _
    $region13: #{tpu_custom_call.1} parent=1 // pred_fallthru
      _
    // Predicated region
    $region14: #{tpu_custom_call.1} parent=1 // pred_check
      _
    $region15: #{tpu_custom_call.1} parent=1 // pred_check_branch
      %18 = sbr.rel (0) target = $region17
    $region16: #{tpu_custom_call.1} parent=1 // pred_region
      _
    $region17: #{tpu_custom_call.1} parent=1 // pred_fallthru
      _
    // Predicated region
    $region18: #{tpu_custom_call.1} parent=1 // pred_check
      _
    $region19: #{tpu_custom_call.1} parent=1 // pred_check_branch
      %20 = sbr.rel (0) target = $region21
    $region20: #{tpu_custom_call.1} parent=1 // pred_region
      _
    $region21: #{tpu_custom_call.1} parent=1 // pred_fallthru
      _
    %v21 = vld [vmem:[%s0] sm:$0xff]
    %v22 = vld [vmem:[%s4] sm:$0x1]
    %v23 = vld [vmem:[%s1] sm:$0xff]
    %v24 = vld [vmem:[%s1 + $0x8] sm:$0x3]
    %v26 = vlaneseq
    %v27 = vshrl.u32 %v26, 7
    %v28 = vsub.s32 0, %v27
    %v29 = vrot.slane %v22, %v28
    %vm31 = vcmask 80896
    %v33 = vsel %vm31, %v21, 0
    %vm35 = vcmask 1041408
    %v37 = vsel %vm35, %v24, 0
    %39 = vmatprep.subr.mxu0 0.0
    %40 = vmatpush1.msra.mxu0 %v23
    %41 = vmatprep.subr.mxu0 0.0
    %42 = vmatpush1.msra.mxu0 %v37
    %43 = vmatprep.subr.mxu0 0.0
    %44 = vmatpush1.msra.mxu0 0.0
    %45 = vmatprep.subr.mxu0 0.0
    %46 = vmatpush1.msra.mxu0 0.0
    %47 = vmatprep.subr.mxu0 0.0
    %48 = vmatpush1.msra.mxu0 0.0
    %49 = vmatprep.subr.mxu0 0.0
    %50 = vmatpush1.msra.mxu0 0.0
    %51 = vmatprep.subr.mxu0 0.0
    %52 = vmatpush1.msra.mxu0 0.0
    %53 = vmatprep.subr.mxu0 0.0
    %54 = vmatpush1.msra.mxu0 0.0
    %55 = vmatprep.subr.mxu0 0.0
    %56 = vmatpush1.msra.mxu0 0.0
    %57 = vmatprep.subr.mxu0 0.0
    %58 = vmatpush1.msra.mxu0 0.0
    %59 = vmatprep.subr.mxu0 0.0
    %60 = vmatpush1.msra.mxu0 0.0
    %61 = vmatprep.subr.mxu0 0.0
    %62 = vmatpush1.msra.mxu0 0.0
    %63 = vmatprep.subr.mxu0 0.0
    %64 = vmatpush1.msra.mxu0 0.0
    %65 = vmatprep.subr.mxu0 0.0
    %66 = vmatpush1.msra.mxu0 0.0
    %67 = vmatprep.subr.mxu0 0.0
    %68 = vmatpush1.msra.mxu0 0.0
    %69 = vmatprep.subr.mxu0 0.0
    %70 = vmatpush1.msra.mxu0 0.0
    %71 = vmatprep.subr.mxu0 0.0
    %72 = vmatpush1.msra.mxu0 0.0
    %73 = vmatprep.subr.mxu0 0.0
    %74 = vmatpush1.msra.mxu0 0.0
    %75 = vmatprep.subr.mxu0 0.0
    %76 = vmatpush1.msra.mxu0 0.0
    %77 = vmatprep.subr.mxu0 0.0
    %78 = vmatpush1.msra.mxu0 0.0
    %79 = vmatprep.subr.mxu0 0.0
    %80 = vmatpush1.msra.mxu0 0.0
    %81 = vmatprep.subr.mxu0 0.0
    %82 = vmatpush1.msra.mxu0 0.0
    %83 = vmatprep.subr.mxu0 0.0
    %84 = vmatpush1.msra.mxu0 0.0
    %85 = vmatprep.subr.mxu0 0.0
    %86 = vmatpush1.msra.mxu0 0.0
    %87 = vmatprep.subr.mxu0 0.0
    %88 = vmatpush1.msra.mxu0 0.0
    %89 = vmatprep.subr.mxu0 0.0
    %90 = vmatpush1.msra.mxu0 0.0
    %91 = vmatprep.subr.mxu0 0.0
    %92 = vmatpush1.msra.mxu0 0.0
    %93 = vmatprep.subr.mxu0 0.0
    %94 = vmatpush1.msra.mxu0 0.0
    %95 = vmatprep.subr.mxu0 0.0
    %96 = vmatpush1.msra.mxu0 0.0
    %97 = vmatprep.subr.mxu0 0.0
    %98 = vmatpush1.msra.mxu0 0.0
    %99 = vmatprep.subr.mxu0 0.0
    %100 = vmatpush1.msra.mxu0 0.0
    %101 = vmatprep.subr.mxu0 0.0
    %102 = vmatpush1.msra.mxu0 0.0
    %103 = vmatprep.mubr.f32.mxu0 0.0
    %104 = vmatmul.mubr.f32.gmra.mrb[0].mxu0 %v33
    %v105 = vpop.f32.mrb[0].mxu0
    %v106 = vadd.f32 %v29, %v105
    %v107 = vpop.f32.mrb[0].mxu0
    %108 = vdwg.mxu0
    %v109 = vmax.f32 %v106, 0.0
    %v110 = vld [vmem:[%s2] sm:$0xff]
    %v111 = vld [vmem:[%s2 + $0x8] sm:$0xff]
    %v112 = vld [vmem:[%s2 + $0x10] sm:$0xff]
    %v113 = vld [vmem:[%s2 + $0x18] sm:$0xff]
    %114 = vrot.lane.b32.xlu0 %v29, 96
    %v115 = vpop.permute.xlu0 %114
    %vm117 = vcmask 261120
    %v119 = vsel %vm117, %v109, 0
    %121 = vmatprep.subr.mxu0 0.0
    %122 = vmatpush1.msra.mxu0 %v110
    %123 = vmatprep.subr.mxu0 0.0
    %124 = vmatpush1.msra.mxu0 %v111
    %125 = vmatprep.subr.mxu0 0.0
    %126 = vmatpush1.msra.mxu0 %v112
    %127 = vmatprep.subr.mxu0 0.0
    %128 = vmatpush1.msra.mxu0 %v113
    %129 = vmatprep.subr.mxu0 0.0
    %130 = vmatpush1.msra.mxu0 0.0
    %131 = vmatprep.subr.mxu0 0.0
    %132 = vmatpush1.msra.mxu0 0.0
    %133 = vmatprep.subr.mxu0 0.0
    %134 = vmatpush1.msra.mxu0 0.0
    %135 = vmatprep.subr.mxu0 0.0
    %136 = vmatpush1.msra.mxu0 0.0
    %137 = vmatprep.subr.mxu0 0.0
    %138 = vmatpush1.msra.mxu0 0.0
    %139 = vmatprep.subr.mxu0 0.0
    %140 = vmatpush1.msra.mxu0 0.0
    %141 = vmatprep.subr.mxu0 0.0
    %142 = vmatpush1.msra.mxu0 0.0
    %143 = vmatprep.subr.mxu0 0.0
    %144 = vmatpush1.msra.mxu0 0.0
    %145 = vmatprep.subr.mxu0 0.0
    %146 = vmatpush1.msra.mxu0 0.0
    %147 = vmatprep.subr.mxu0 0.0
    %148 = vmatpush1.msra.mxu0 0.0
    %149 = vmatprep.subr.mxu0 0.0
    %150 = vmatpush1.msra.mxu0 0.0
    %151 = vmatprep.subr.mxu0 0.0
    %152 = vmatpush1.msra.mxu0 0.0
    %153 = vmatprep.subr.mxu0 0.0
    %154 = vmatpush1.msra.mxu0 0.0
    %155 = vmatprep.subr.mxu0 0.0
    %156 = vmatpush1.msra.mxu0 0.0
    %157 = vmatprep.subr.mxu0 0.0
    %158 = vmatpush1.msra.mxu0 0.0
    %159 = vmatprep.subr.mxu0 0.0
    %160 = vmatpush1.msra.mxu0 0.0
    %161 = vmatprep.subr.mxu0 0.0
    %162 = vmatpush1.msra.mxu0 0.0
    %163 = vmatprep.subr.mxu0 0.0
    %164 = vmatpush1.msra.mxu0 0.0
    %165 = vmatprep.subr.mxu0 0.0
    %166 = vmatpush1.msra.mxu0 0.0
    %167 = vmatprep.subr.mxu0 0.0
    %168 = vmatpush1.msra.mxu0 0.0
    %169 = vmatprep.subr.mxu0 0.0
    %170 = vmatpush1.msra.mxu0 0.0
    %171 = vmatprep.subr.mxu0 0.0
    %172 = vmatpush1.msra.mxu0 0.0
    %173 = vmatprep.subr.mxu0 0.0
    %174 = vmatpush1.msra.mxu0 0.0
    %175 = vmatprep.subr.mxu0 0.0
    %176 = vmatpush1.msra.mxu0 0.0
    %177 = vmatprep.subr.mxu0 0.0
    %178 = vmatpush1.msra.mxu0 0.0
    %179 = vmatprep.subr.mxu0 0.0
    %180 = vmatpush1.msra.mxu0 0.0
    %181 = vmatprep.subr.mxu0 0.0
    %182 = vmatpush1.msra.mxu0 0.0
    %183 = vmatprep.subr.mxu0 0.0
    %184 = vmatpush1.msra.mxu0 0.0
    %185 = vmatprep.mubr.f32.mxu0 0.0
    %186 = vmatmul.mubr.f32.gmra.mrb[0].mxu0 %v119
    %v187 = vpop.f32.mrb[0].mxu0
    %v188 = vadd.f32 %v115, %v187
    %v189 = vpop.f32.mrb[0].mxu0
    %190 = vdwg.mxu0
    %v191 = vmax.f32 %v188, 0.0
    %v192 = vld [vmem:[%s3] sm:$0xff]
    %v193 = vld [vmem:[%s3 + $0x8] sm:$0xff]
    %194 = vset.pattern.permute.xlu0 0
    %195 = vperm.xlu0 %194, %v21
    %v196 = vpop.permute.xlu0 %195
    %v198 = vmul.f32 %v196, %v29
    %200 = vrot.lane.b32.xlu0 %v198, 75
    %v201 = vpop.permute.xlu0 %200
    %vm203 = vcmask 130048
    %v205 = vsel %vm203, %v191, 0
    %207 = vmatprep.subr.mxu0 0.0
    %208 = vmatpush1.msra.mxu0 %v192
    %209 = vmatprep.subr.mxu0 0.0
    %210 = vmatpush1.msra.mxu0 %v193
    %211 = vmatprep.subr.mxu0 0.0
    %212 = vmatpush1.msra.mxu0 0.0
    %213 = vmatprep.subr.mxu0 0.0
    %214 = vmatpush1.msra.mxu0 0.0
    %215 = vmatprep.subr.mxu0 0.0
    %216 = vmatpush1.msra.mxu0 0.0
    %217 = vmatprep.subr.mxu0 0.0
    %218 = vmatpush1.msra.mxu0 0.0
    %219 = vmatprep.subr.mxu0 0.0
    %220 = vmatpush1.msra.mxu0 0.0
    %221 = vmatprep.subr.mxu0 0.0
    %222 = vmatpush1.msra.mxu0 0.0
    %223 = vmatprep.subr.mxu0 0.0
    %224 = vmatpush1.msra.mxu0 0.0
    %225 = vmatprep.subr.mxu0 0.0
    %226 = vmatpush1.msra.mxu0 0.0
    %227 = vmatprep.subr.mxu0 0.0
    %228 = vmatpush1.msra.mxu0 0.0
    %229 = vmatprep.subr.mxu0 0.0
    %230 = vmatpush1.msra.mxu0 0.0
    %231 = vmatprep.subr.mxu0 0.0
    %232 = vmatpush1.msra.mxu0 0.0
    %233 = vmatprep.subr.mxu0 0.0
    %234 = vmatpush1.msra.mxu0 0.0
    %235 = vmatprep.subr.mxu0 0.0
    %236 = vmatpush1.msra.mxu0 0.0
    %237 = vmatprep.subr.mxu0 0.0
    %238 = vmatpush1.msra.mxu0 0.0
    %239 = vmatprep.subr.mxu0 0.0
    %240 = vmatpush1.msra.mxu0 0.0
    %241 = vmatprep.subr.mxu0 0.0
    %242 = vmatpush1.msra.mxu0 0.0
    %243 = vmatprep.subr.mxu0 0.0
    %244 = vmatpush1.msra.mxu0 0.0
    %245 = vmatprep.subr.mxu0 0.0
    %246 = vmatpush1.msra.mxu0 0.0
    %247 = vmatprep.subr.mxu0 0.0
    %248 = vmatpush1.msra.mxu0 0.0
    %249 = vmatprep.subr.mxu0 0.0
    %250 = vmatpush1.msra.mxu0 0.0
    %251 = vmatprep.subr.mxu0 0.0
    %252 = vmatpush1.msra.mxu0 0.0
    %253 = vmatprep.subr.mxu0 0.0
    %254 = vmatpush1.msra.mxu0 0.0
    %255 = vmatprep.subr.mxu0 0.0
    %256 = vmatpush1.msra.mxu0 0.0
    %257 = vmatprep.subr.mxu0 0.0
    %258 = vmatpush1.msra.mxu0 0.0
    %259 = vmatprep.subr.mxu0 0.0
    %260 = vmatpush1.msra.mxu0 0.0
    %261 = vmatprep.subr.mxu0 0.0
    %262 = vmatpush1.msra.mxu0 0.0
    %263 = vmatprep.subr.mxu0 0.0
    %264 = vmatpush1.msra.mxu0 0.0
    %265 = vmatprep.subr.mxu0 0.0
    %266 = vmatpush1.msra.mxu0 0.0
    %267 = vmatprep.subr.mxu0 0.0
    %268 = vmatpush1.msra.mxu0 0.0
    %269 = vmatprep.subr.mxu0 0.0
    %270 = vmatpush1.msra.mxu0 0.0
    %271 = vmatprep.mubr.f32.mxu0 0.0
    %272 = vmatmul.mubr.f32.gmra.mrb[0].mxu0 %v205
    %v273 = vpop.f32.mrb[0].mxu0
    %v274 = vadd.f32 %v201, %v273
    %v275 = vpop.f32.mrb[0].mxu0
    %276 = vdwg.mxu0
    %277 = vrot.lane.b32.xlu0 %v29, 80
    %v278 = vpop.permute.xlu0 %277
    %v280 = vadd.f32 %v274, %v278
    %vm281 = vcmask 39936
    %282 = vst.msk [vmem:[#allocation2] sm:$0xff] %vm281, %v280
    // Predicated region
    $region22: #{tpu_custom_call.1} parent=1 // pred_check
      _
    $region23: #{tpu_custom_call.1} parent=1 // pred_check_branch
      %284 = sbr.rel (0) target = $region25
    $region24: #{tpu_custom_call.1} parent=1 // pred_region
      %s286 = ssub.s32 128, 128
      %287 = vsyncadd [#allocation3], %s286
      %s289 = sshll.u32 [#allocation2], 4
      %s290 = int_to_ptr.vmem [resolvable:$true] %s289
      %292 = dma.vmem_to_hbm [thread:$0]  %s290, 128, %s5, [#allocation3]
    $region25: #{tpu_custom_call.1} parent=1 // pred_fallthru
      _
    // Predicated region
    $region26: #{tpu_custom_call.1} parent=1 // pred_check
      _
    $region27: #{tpu_custom_call.1} parent=1 // pred_check_branch
      %294 = sbr.rel (0) target = $region29
    $region28: #{tpu_custom_call.1} parent=1 // pred_region
      %295 = dma.done [#allocation3], 128
    $region29: #{tpu_custom_call.1} parent=1 // pred_fallthru
      _
    %296 = vsyncpa [#allocation3], 1

</llo_original>
